<compile_context>
chip_gen: v5e
topology: v5e:2x2
jax: 0.10.0
libtpu: 0.0.40
codegen_flags: <defaults>
</compile_context>

<pallas_src>
import functools

import jax
import jax.numpy as jnp
from jax.experimental import pallas as pl
from jax.experimental.pallas import tpu as pltpu


_MIB = 1024 * 1024


def _chip_info():
    """Returns (vmem_capacity_bytes, preferred_min_grid_steps); safe off-TPU."""
    vmem = 128 * _MIB          # v5e / v6e physical VMEM per TensorCore
    min_steps = 3              # enough grid steps for effective double-buffering
    try:
        info = pltpu.get_tpu_info()
        vmem = int(getattr(info, "vmem_capacity_bytes", vmem))
        # Heuristic: chips exposing 64 MiB per TensorCore (v7x-class) run two
        # TensorCores per chip -> want >=4 steps so each core still pipelines DMA.
        if vmem <= 64 * _MIB:
            min_steps = 4
    except Exception:
        pass
    return vmem, min_steps


def _build_stages(uniq, H, W, mode):
    """Hierarchical stage plan.  Each stage halves/shrinks (h, w) by factor m."""
    stages = []
    h, w, k = H, W, 1
    for li, s in enumerate(uniq):
        target = 1 << s
        f = target // k                       # power of two >= 2
        subs = [2] * (f.bit_length() - 1) if mode == "max" else [f]
        for j, m in enumerate(subs):
            ho, wo = h // m, w // m
            stages.append(dict(m=m, h_in=h, w_in=w, h_out=ho, w_out=wo,
                               emit=(li if j == len(subs) - 1 else -1),
                               k=k * m))
            h, w, k = ho, wo, k * m
    return stages


def _width_matrices(w_in, m, mode, dtype):
    """Constant 0/1 matrices pooling groups of m adjacent columns.

    sum mode: one (w_in, w_in//m) matrix with m ones per column.
    max mode: m one-hot selection matrices (combined with elementwise max
    in-kernel).  Trailing columns beyond (w_in//m)*m are dropped (floor
    semantics, as in PyTorch).
    """
    i = jnp.arange(w_in, dtype=jnp.int32)[:, None]
    o = jnp.arange(w_in // m, dtype=jnp.int32)[None, :]
    if mode == "sum":
        return [(i // m == o).astype(dtype)]
    return [(i == o * m + r).astype(dtype) for r in range(m)]


def _pyramid_kernel(x_ref, *refs, b, stages, n_mats, n_out, cdtype, pool, is_bool):
    """x_ref: (b*H, W).  refs = resident pooling matrices, level outputs, scratch."""
    mats = refs[:n_mats]
    outs = refs[n_mats:n_mats + n_out]
    scrs = refs[n_mats + n_out:]

    v = x_ref[...].astype(cdtype)       # no-op for f32/bf16; int8(bool) -> bf16
    use_max = (pool == "max") and (not is_bool)
    mi = 0
    for si, st in enumerate(stages):
        m, rows_out = st["m"], b * st["h_out"]

        # ---- width (lane-dim) pooling: 2-D MXU matmul(s) vs resident matrices ----
        if use_max:
            vw = None
            for _ in range(m):
                p = jnp.dot(v, mats[mi][...], preferred_element_type=jnp.float32)
                mi += 1
                vw = p if vw is None else jnp.maximum(vw, p)
        else:
            vw = jnp.dot(v, mats[mi][...], preferred_element_type=jnp.float32)
            mi += 1

        # ---- height (sublane-dim) pooling: strided reads from VMEM scratch ----
        scr = scrs[si]
        scr[...] = vw
        vh = None
        for r in range(m):
            part = scr[pl.ds(r, rows_out, stride=m), :]
            if vh is None:
                vh = part
            else:
                vh = jnp.maximum(vh, part) if use_max else vh + part

        # ---- emit this pyramid level if it was requested ----
        e = st["emit"]
        if e >= 0:
            o_ref = outs[e]
            if is_bool:
                o_ref[...] = (vh > 0.5).astype(o_ref.dtype)      # OR over the window
            elif pool == "avg":
                o_ref[...] = (vh * (1.0 / float(st["k"] * st["k"]))).astype(o_ref.dtype)
            else:
                o_ref[...] = vh.astype(o_ref.dtype)
            # TODO(synk): when (W >> s) << 128, present the level lane-dense as
            # (b, ho*wo) blocks to avoid masked vst / narrow HBM writeback.

        v = vh                                            # f32 input to next stage


def _est_vmem_bytes(b, H, W, in_item, cd_item, out_item, stages, levels):
    """Conservative per-grid-step VMEM working-set estimate."""
    blk = b * H * W
    tot = 2 * blk * in_item                               # double-buffered input
    if cd_item != in_item:
        tot += blk * cd_item                              # in-kernel cast copy
    for st in stages:
        tot += 2 * b * st["h_in"] * st["w_out"] * 4       # width result + f32 scratch
    for s in levels:
        tot += 2 * b * (H >> s) * (W >> s) * out_item     # double-buffered outputs
    return tot + 256 * 1024                               # pooling matrices + slack


def _pick_channels_per_block(nc, H, W, in_item, cd_item, out_item, stages, levels,
                             budget, min_steps, force_single):
    """Largest channel batch b dividing nc that fits the VMEM budget, preferring
    >= min_steps grid steps and dtype-aware sublane alignment of the block."""
    if force_single:
        return 1
    subl = {4: 8, 2: 16, 1: 32}.get(in_item, 8)           # f32 / bf16 / int8 packing
    fits = [b for b in range(1, nc + 1)
            if nc % b == 0
            and _est_vmem_bytes(b, H, W, in_item, cd_item, out_item,
                                stages, levels) <= budget]
    if not fits:
        # TODO(synk): spatially tile H when even one channel plane overflows VMEM.
        return 1
    tiers = (
        [b for b in fits if nc // b >= min_steps and (b * H) % subl == 0],
        [b for b in fits if nc // b >= min_steps],
        fits,
    )
    for t in tiers:
        if t:
            return max(t)
    return 1


def image_pyramids(x, scales, pool="avg"):
    """JAX/Pallas equivalent of ImagePyramids.forward for NCHW input."""
    if pool not in ("avg", "max"):
        raise NotImplementedError()
    N, C, H, W = x.shape
    is_bool = (x.dtype == jnp.bool_)

    uniq = sorted({int(s) for s in scales if int(s) >= 1})
    level_out = {}
    if uniq:
        smax = uniq[-1]
        if (H >> smax) == 0 or (W >> smax) == 0:
            raise ValueError("pooling window larger than the image")

        if is_bool:
            xin, out_dtype, cdtype = x.astype(jnp.int8), jnp.int8, jnp.bfloat16
        elif x.dtype == jnp.bfloat16:
            xin, out_dtype, cdtype = x, x.dtype, jnp.bfloat16
        else:
            xin, out_dtype, cdtype = x, x.dtype, jnp.float32
            # TODO(synk): wide-int inputs are pooled through f32 (inexact > 2^24).

        mode = "max" if (pool == "max" and not is_bool) else "sum"
        stages = _build_stages(uniq, H, W, mode)

        nc = N * C
        xin2 = xin.reshape(nc * H, W)                     # contiguous fold (free)

        vmem_cap, min_steps = _chip_info()
        in_item = jnp.dtype(xin.dtype).itemsize
        cd_item = jnp.dtype(cdtype).itemsize
        out_item = jnp.dtype(out_dtype).itemsize

        # Channel folding on the sublane axis is only exact when every pooling
        # step divides the height cleanly; otherwise pool one channel per step.
        force_single = (H % (1 << smax)) != 0

        budget = vmem_cap // 3
        b = _pick_channels_per_block(nc, H, W, in_item, cd_item, out_item,
                                     stages, uniq, budget, min_steps, force_single)
        est = _est_vmem_bytes(b, H, W, in_item, cd_item, out_item, stages, uniq)
        vmem_limit = int(min(max(32 * _MIB, 2 * est + 4 * _MIB),
                             max(vmem_cap - 2 * _MIB, 32 * _MIB)))

        # Constant pooling matrices: stage 0 in the compute dtype (bf16 fast MXU
        # path for bf16/bool inputs), later stages in f32 to match f32 intermediates.
        mats = []
        for si, st in enumerate(stages):
            mdt = cdtype if si == 0 else jnp.float32
            mats.extend(_width_matrices(st["w_in"], st["m"], mode, mdt))

        in_specs = [pl.BlockSpec((b * H, W), lambda i: (i, 0))]
        in_specs += [pl.BlockSpec(m_.shape, lambda i: (0, 0)) for m_ in mats]
        out_specs = [pl.BlockSpec((b * (H >> s), W >> s), lambda i: (i, 0))
                     for s in uniq]
        out_shapes = [jax.ShapeDtypeStruct((nc * (H >> s), W >> s), out_dtype)
                      for s in uniq]
        scratch = [pltpu.VMEM((b * st["h_in"], st["w_out"]), jnp.float32)
                   for st in stages]

        kernel = functools.partial(
            _pyramid_kernel, b=b, stages=tuple(stages), n_mats=len(mats),
            n_out=len(uniq), cdtype=cdtype, pool=pool, is_bool=is_bool)

        outs = pl.pallas_call(
            kernel,
            out_shape=out_shapes,
            grid=(nc // b,),
            in_specs=in_specs,
            out_specs=out_specs,
            scratch_shapes=scratch,
            compiler_params=pltpu.CompilerParams(
                dimension_semantics=("parallel",),
                vmem_limit_bytes=vmem_limit),
        )(xin2, *mats)
        if not isinstance(outs, (list, tuple)):
            outs = (outs,)
        for s, o in zip(uniq, outs):
            o = o.reshape(N, C, H >> s, W >> s)
            if is_bool:
                o = (o != 0)
            level_out[s] = o

    results = []
    for s in scales:
        s = int(s)
        # 1x1 / stride-1 pooling is the identity (bool round-trips exactly).
        results.append(x if s <= 0 else level_out[s])
    return results


def _reference_pool(x, k, pool):
    N, C, H, W = x.shape
    Ho, Wo = H // k, W // k
    xr = x[:, :, : Ho * k, : Wo * k].reshape(N, C, Ho, k, Wo, k)
    if pool == "avg":
        return xr.mean(axis=(3, 5))
    return xr.max(axis=(3, 5))


if __name__ == "__main__":
    key = jax.random.PRNGKey(0)
    N, C, H, W = 2, 4, 16, 16
    scales = [0, 1, 2]  # pooling windows 1, 2, 4

    x = jax.random.normal(key, (N, C, H, W), dtype=jnp.float32)

    outs_avg = [jax.block_until_ready(o) for o in image_pyramids(x, scales, "avg")]
    outs_max = [jax.block_until_ready(o) for o in image_pyramids(x, scales, "max")]

    xb = x > 0.5
    outs_b_avg = [jax.block_until_ready(o) for o in image_pyramids(xb, scales, "avg")]
    outs_b_max = [jax.block_until_ready(o) for o in image_pyramids(xb, scales, "max")]

    ok = True
    for s, oa, om, oba, obm in zip(scales, outs_avg, outs_max, outs_b_avg, outs_b_max):
        k = 1 << s
        ra = _reference_pool(x, k, "avg")
        rm = _reference_pool(x, k, "max")
        rb_a = _reference_pool(xb.astype(jnp.float32), k, "avg") != 0
        rb_m = _reference_pool(xb.astype(jnp.float32), k, "max") != 0
        ok &= oa.shape == (N, C, H // k, W // k)
        ok &= bool(jnp.allclose(oa, ra, atol=1e-5, rtol=1e-5))
        ok &= bool(jnp.allclose(om, rm, atol=1e-5, rtol=1e-5))
        ok &= bool(jnp.array_equal(oba, rb_a)) and oba.dtype == jnp.bool_
        ok &= bool(jnp.array_equal(obm, rb_m)) and obm.dtype == jnp.bool_

    if ok:
        print("KERNEL_OK")
    else:
        raise SystemExit("mismatch vs reference")
</pallas_src>

<mosaic_0001>
module attributes {stable_mosaic.version = 11 : i64} {
  func.func @_pyramid_kernel(%arg0: i32, %arg1: memref<32x16xf32, #tpu.memory_space<vmem>>, %arg2: memref<16x8xf32, #tpu.memory_space<vmem>>, %arg3: memref<8x4xf32, #tpu.memory_space<vmem>>, %arg4: memref<16x8xf32, #tpu.memory_space<vmem>>, %arg5: memref<8x4xf32, #tpu.memory_space<vmem>>, %arg6: memref<32x8xf32, #tpu.memory_space<vmem>>, %arg7: memref<16x4xf32, #tpu.memory_space<vmem>>) attributes {dimension_semantics = [#tpu.dimension_semantics<parallel>], iteration_bounds = array<i64: 4>, scalar_prefetch = 0 : i64, scratch_operands = 2 : i64, tpu.core_type = #tpu.core_type<tc>, window_params = [{transform_indices = @transform_0, window_bounds = array<i64: 32, 16>}, {pipeline_mode = #tpu.pipeline_mode<synchronous>, transform_indices = @transform_1, window_bounds = array<i64: 16, 8>}, {pipeline_mode = #tpu.pipeline_mode<synchronous>, transform_indices = @transform_2, window_bounds = array<i64: 8, 4>}, {transform_indices = @transform_3, window_bounds = array<i64: 16, 8>}, {transform_indices = @transform_4, window_bounds = array<i64: 8, 4>}]} {
    %c0 = arith.constant 0 : index
    %c0_0 = arith.constant 0 : index
    %0 = vector.load %arg1[%c0, %c0_0] : memref<32x16xf32, #tpu.memory_space<vmem>>, vector<32x16xf32>
    %c0_1 = arith.constant 0 : index
    %c0_2 = arith.constant 0 : index
    %1 = vector.load %arg2[%c0_1, %c0_2] : memref<16x8xf32, #tpu.memory_space<vmem>>, vector<16x8xf32>
    %cst = arith.constant dense<0.000000e+00> : vector<32x8xf32>
    %2 = tpu.matmul %0, %1, %cst {dimension_numbers = #tpu.dot_dimension_numbers<[1], [0], [0], [1], [0, 0, 1, 1], [], []>} : vector<32x16xf32>, vector<16x8xf32>, vector<32x8xf32> -> vector<32x8xf32>
    %c0_3 = arith.constant 0 : index
    %c0_4 = arith.constant 0 : index
    %3 = vector.load %arg6[%c0_3, %c0_4] : memref<32x8xf32, #tpu.memory_space<vmem>>, vector<32x8xf32>
    tpu.vector_store %arg6[%c0_3, %c0_4], %2 {strides = array<i32>} : memref<32x8xf32, #tpu.memory_space<vmem>>, vector<32x8xf32>,
    %c0_5 = arith.constant 0 : index
    %c0_6 = arith.constant 0 : index
    %4 = tpu.strided_load %arg6[%c0_5, %c0_6] {strides = array<i32: 2, 1>} : memref<32x8xf32, #tpu.memory_space<vmem>>, vector<16x8xf32>
    %c1 = arith.constant 1 : index
    %c0_7 = arith.constant 0 : index
    %5 = tpu.strided_load %arg6[%c1, %c0_7] {strides = array<i32: 2, 1>} : memref<32x8xf32, #tpu.memory_space<vmem>>, vector<16x8xf32>
    %6 = arith.addf %4, %5 : vector<16x8xf32>
    %cst_8 = arith.constant 2.500000e-01 : f32
    %7 = vector.broadcast %cst_8 : f32 to vector<16x8xf32>
    %8 = arith.mulf %6, %7 : vector<16x8xf32>
    %c0_9 = arith.constant 0 : index
    %c0_10 = arith.constant 0 : index
    %9 = vector.load %arg4[%c0_9, %c0_10] : memref<16x8xf32, #tpu.memory_space<vmem>>, vector<16x8xf32>
    tpu.vector_store %arg4[%c0_9, %c0_10], %8 {strides = array<i32>} : memref<16x8xf32, #tpu.memory_space<vmem>>, vector<16x8xf32>,
    %c0_11 = arith.constant 0 : index
    %c0_12 = arith.constant 0 : index
    %10 = vector.load %arg3[%c0_11, %c0_12] : memref<8x4xf32, #tpu.memory_space<vmem>>, vector<8x4xf32>
    %cst_13 = arith.constant dense<0.000000e+00> : vector<16x4xf32>
    %11 = tpu.matmul %6, %10, %cst_13 {dimension_numbers = #tpu.dot_dimension_numbers<[1], [0], [0], [1], [0, 0, 1, 1], [], []>} : vector<16x8xf32>, vector<8x4xf32>, vector<16x4xf32> -> vector<16x4xf32>
    %c0_14 = arith.constant 0 : index
    %c0_15 = arith.constant 0 : index
    %12 = vector.load %arg7[%c0_14, %c0_15] : memref<16x4xf32, #tpu.memory_space<vmem>>, vector<16x4xf32>
    tpu.vector_store %arg7[%c0_14, %c0_15], %11 {strides = array<i32>} : memref<16x4xf32, #tpu.memory_space<vmem>>, vector<16x4xf32>,
    %c0_16 = arith.constant 0 : index
    %c0_17 = arith.constant 0 : index
    %13 = tpu.strided_load %arg7[%c0_16, %c0_17] {strides = array<i32: 2, 1>} : memref<16x4xf32, #tpu.memory_space<vmem>>, vector<8x4xf32>
    %c1_18 = arith.constant 1 : index
    %c0_19 = arith.constant 0 : index
    %14 = tpu.strided_load %arg7[%c1_18, %c0_19] {strides = array<i32: 2, 1>} : memref<16x4xf32, #tpu.memory_space<vmem>>, vector<8x4xf32>
    %15 = arith.addf %13, %14 : vector<8x4xf32>
    %cst_20 = arith.constant 6.250000e-02 : f32
    %16 = vector.broadcast %cst_20 : f32 to vector<8x4xf32>
    %17 = arith.mulf %15, %16 : vector<8x4xf32>
    %c0_21 = arith.constant 0 : index
    %c0_22 = arith.constant 0 : index
    %18 = vector.load %arg5[%c0_21, %c0_22] : memref<8x4xf32, #tpu.memory_space<vmem>>, vector<8x4xf32>
    tpu.vector_store %arg5[%c0_21, %c0_22], %17 {strides = array<i32>} : memref<8x4xf32, #tpu.memory_space<vmem>>, vector<8x4xf32>,
    return
  }
  func.func @transform_0(%arg0: i32) -> (i32, i32) {
    %c0_i32 = arith.constant 0 : i32
    %c0_i32_0 = arith.constant 0 : i32
    return %arg0, %c0_i32 : i32, i32
  }
  func.func @transform_1(%arg0: i32) -> (i32, i32) {
    %c0_i32 = arith.constant 0 : i32
    %c0_i32_0 = arith.constant 0 : i32
    %c0_i32_1 = arith.constant 0 : i32
    return %c0_i32, %c0_i32_0 : i32, i32
  }
  func.func @transform_2(%arg0: i32) -> (i32, i32) {
    %c0_i32 = arith.constant 0 : i32
    %c0_i32_0 = arith.constant 0 : i32
    %c0_i32_1 = arith.constant 0 : i32
    return %c0_i32, %c0_i32_0 : i32, i32
  }
  func.func @transform_3(%arg0: i32) -> (i32, i32) {
    %c0_i32 = arith.constant 0 : i32
    %c0_i32_0 = arith.constant 0 : i32
    return %arg0, %c0_i32 : i32, i32
  }
  func.func @transform_4(%arg0: i32) -> (i32, i32) {
    %c0_i32 = arith.constant 0 : i32
    %c0_i32_0 = arith.constant 0 : i32
    return %arg0, %c0_i32 : i32, i32
  }
}

</mosaic_0001>

<llo_original>
// kernel: tpu_custom_call.1
$region0: #{tpu_custom_call.1}
  #allocation0 [shape = 'u32[]', space=smem, size = 0x4, offset = 0x4, fixed_abs, tag = 'smem constant byte address 0x4 - core index']
  #allocation1 [shape = 'u32[72,128]{1,0:T(1,128)}', space=vmem, size = 0x9000, scoped, tag = 'internal scratch']
  #allocation2 [shape = 'f32[32,8]{1,0:T(8,128)}', space=vmem, size = 0x4000, scoped, tag = 'scratch operand']
  #allocation3 [shape = 'f32[16,4]{1,0:T(8,128)}', space=vmem, size = 0x2000, scoped, tag = 'scratch operand']
  %s0 = inlined_call_operand.vmem [shape: f32[128,16], index: 0, kind: input, shape index: {}]
  %s1 = inlined_call_operand.vmem [shape: f32[16,8], index: 1, kind: input, shape index: {}]
  %s2 = inlined_call_operand.vmem [shape: f32[8,4], index: 2, kind: input, shape index: {}]
  %s3 = inlined_call_operand.vmem [shape: f32[64,8], index: 3, kind: output, shape index: {0}]
  %s4 = inlined_call_operand.vmem [shape: f32[32,4], index: 4, kind: output, shape index: {1}]
  %5 = xla_tuple %s3, %s4
  %s6 = sld [smem:[#allocation0]]
  $region53: #{tpu_custom_call.1} parent=0
    _
  %s8 = ssub.s32 1, %s6
  %s9 = scalar_select 0, %s8, %s6
  loop: start=0, step=1, limit=6
  $region2: #{tpu_custom_call.1} parent=0 // loop_pre_header
    _
  $region3: #{tpu_custom_call.1} parent=0 // loop_header
    %s11 = sphi 0, %s15
    %p12 = scmp.ge.s32.totalorder %s11, 6
    %s21 = sphi 0, %s23
    %s24 = sphi 0, %s21
    %s25 = sphi 0, %s24
    %s41 = sphi 0, %s25
    %s45 = sphi 0, %s45
    %s47 = sphi 0, %s45
    %s48 = sphi 0, %s47
    %s62 = sphi 0, %s48
    %s66 = sphi 0, %s66
    %s68 = sphi 0, %s66
    %s69 = sphi 0, %s68
    %s83 = sphi 0, %s69
    %s89 = sphi 0, %s91
    %s92 = sphi 0, %s89
    %s93 = sphi 0, %s92
    %s109 = sphi 0, %s93
    %s115 = sphi 0, %s117
    %s118 = sphi 0, %s115
    %s119 = sphi 0, %s118
    %s135 = sphi 0, %s119
  $region4: #{tpu_custom_call.1} parent=0 // loop_header_branch
    %14 = sbr.rel (%p12) target = $region8
  $region5: #{tpu_custom_call.1} parent=0 // loop_body
    %s16 = ssub.s32 %s11, 1
    %s17 = ssub.s32 %s11, 2
    %s18 = sadd.s32 %s11, 1
    %s19 = ssub.s32 %s11, %s18
    %p20 = scmp.eq.s32.totalorder %s19, 0
    %s22 = sadd.s32 %s21, 1
    %s23 = scalar_select %p20, %s21, %s22
    %p26 = pneg %p20
    %p27 = scmp.eq.s32.totalorder %s11, 3
    %p28 = por %p26, %p27
    %p29 = scmp.ne.s32.totalorder %s21, %s24
    %p30 = scmp.eq.s32.totalorder %s11, 0
    %p31 = por %p29, %p30
    %p32 = scmp.ne.s32.totalorder %s21, %s24
    %p33 = scmp.eq.s32.totalorder %s16, 3
    %p34 = por %p32, %p33
    %p35 = scmp.ne.s32.totalorder %s24, %s25
    %p36 = scmp.eq.s32.totalorder %s16, 0
    %p37 = por %p35, %p36
    %p38 = scmp.ne.s32.totalorder %s24, %s25
    %p39 = scmp.eq.s32.totalorder %s17, 3
    %p40 = por %p38, %p39
    %p42 = scmp.ne.s32.totalorder %s25, %s41
    %p43 = scmp.eq.s32.totalorder %s17, 0
    %p44 = por %p42, %p43
    %s46 = sadd.s32 %s45, 1
    %p49 = scmp.eq.s32.totalorder %s11, 3
    %p50 = scmp.ne.s32.totalorder %s45, %s47
    %p51 = scmp.eq.s32.totalorder %s11, 0
    %p52 = por %p50, %p51
    %p53 = scmp.ne.s32.totalorder %s45, %s47
    %p54 = scmp.eq.s32.totalorder %s16, 3
    %p55 = por %p53, %p54
    %p56 = scmp.ne.s32.totalorder %s47, %s48
    %p57 = scmp.eq.s32.totalorder %s16, 0
    %p58 = por %p56, %p57
    %p59 = scmp.ne.s32.totalorder %s47, %s48
    %p60 = scmp.eq.s32.totalorder %s17, 3
    %p61 = por %p59, %p60
    %p63 = scmp.ne.s32.totalorder %s48, %s62
    %p64 = scmp.eq.s32.totalorder %s17, 0
    %p65 = por %p63, %p64
    %s67 = sadd.s32 %s66, 1
    %p70 = scmp.eq.s32.totalorder %s11, 3
    %p71 = scmp.ne.s32.totalorder %s66, %s68
    %p72 = scmp.eq.s32.totalorder %s11, 0
    %p73 = por %p71, %p72
    %p74 = scmp.ne.s32.totalorder %s66, %s68
    %p75 = scmp.eq.s32.totalorder %s16, 3
    %p76 = por %p74, %p75
    %p77 = scmp.ne.s32.totalorder %s68, %s69
    %p78 = scmp.eq.s32.totalorder %s16, 0
    %p79 = por %p77, %p78
    %p80 = scmp.ne.s32.totalorder %s68, %s69
    %p81 = scmp.eq.s32.totalorder %s17, 3
    %p82 = por %p80, %p81
    %p84 = scmp.ne.s32.totalorder %s69, %s83
    %p85 = scmp.eq.s32.totalorder %s17, 0
    %p86 = por %p84, %p85
    %s87 = ssub.s32 %s11, %s18
    %p88 = scmp.eq.s32.totalorder %s87, 0
    %s90 = sadd.s32 %s89, 1
    %s91 = scalar_select %p88, %s89, %s90
    %p94 = pneg %p88
    %p95 = scmp.eq.s32.totalorder %s11, 3
    %p96 = por %p94, %p95
    %p97 = scmp.ne.s32.totalorder %s89, %s92
    %p98 = scmp.eq.s32.totalorder %s11, 0
    %p99 = por %p97, %p98
    %p100 = scmp.ne.s32.totalorder %s89, %s92
    %p101 = scmp.eq.s32.totalorder %s16, 3
    %p102 = por %p100, %p101
    %p103 = scmp.ne.s32.totalorder %s92, %s93
    %p104 = scmp.eq.s32.totalorder %s16, 0
    %p105 = por %p103, %p104
    %p106 = scmp.ne.s32.totalorder %s92, %s93
    %p107 = scmp.eq.s32.totalorder %s17, 3
    %p108 = por %p106, %p107
    %p110 = scmp.ne.s32.totalorder %s93, %s109
    %p111 = scmp.eq.s32.totalorder %s17, 0
    %p112 = por %p110, %p111
    %s113 = ssub.s32 %s11, %s18
    %p114 = scmp.eq.s32.totalorder %s113, 0
    %s116 = sadd.s32 %s115, 1
    %s117 = scalar_select %p114, %s115, %s116
    %p120 = pneg %p114
    %p121 = scmp.eq.s32.totalorder %s11, 3
    %p122 = por %p120, %p121
    %p123 = scmp.ne.s32.totalorder %s115, %s118
    %p124 = scmp.eq.s32.totalorder %s11, 0
    %p125 = por %p123, %p124
    %p126 = scmp.ne.s32.totalorder %s115, %s118
    %p127 = scmp.eq.s32.totalorder %s16, 3
    %p128 = por %p126, %p127
    %p129 = scmp.ne.s32.totalorder %s118, %s119
    %p130 = scmp.eq.s32.totalorder %s16, 0
    %p131 = por %p129, %p130
    %p132 = scmp.ne.s32.totalorder %s118, %s119
    %p133 = scmp.eq.s32.totalorder %s17, 3
    %p134 = por %p132, %p133
    %p136 = scmp.ne.s32.totalorder %s119, %s135
    %p137 = scmp.eq.s32.totalorder %s17, 0
    %p138 = por %p136, %p137
    %p139 = scmp.le.s32.totalorder 1, %s11
    %p140 = scmp.lt.s32.totalorder %s11, 5
    %p141 = pnand %p139, %p140
    %p142 = pneg %p141
    // Predicated region
    $region9: #{tpu_custom_call.1} parent=5 // pred_check
      _
    $region10: #{tpu_custom_call.1} parent=5 // pred_check_branch
      %144 = sbr.rel (%p141) target = $region12
    $region11: #{tpu_custom_call.1} parent=5 // pred_region
      %s145 = ssub.s32 %s11, 1
      // Predicated region
      $region13: #{tpu_custom_call.1} parent=11 // pred_check
        %p146 = pneg %p58
      $region14: #{tpu_custom_call.1} parent=11 // pred_check_branch
        %148 = sbr.rel (%p146) target = $region16
      $region15: #{tpu_custom_call.1} parent=11 // pred_region
        _
      $region16: #{tpu_custom_call.1} parent=11 // pred_fallthru
        _
      // Predicated region
      $region17: #{tpu_custom_call.1} parent=11 // pred_check
        %p149 = pneg %p79
      $region18: #{tpu_custom_call.1} parent=11 // pred_check_branch
        %151 = sbr.rel (%p149) target = $region20
      $region19: #{tpu_custom_call.1} parent=11 // pred_region
        _
      $region20: #{tpu_custom_call.1} parent=11 // pred_fallthru
        _
    $region12: #{tpu_custom_call.1} parent=5 // pred_fallthru
      _
    %p152 = scmp.lt.s32.totalorder %s11, 4
    // Predicated region
    $region21: #{tpu_custom_call.1} parent=5 // pred_check
      %p153 = pneg %p152
    $region22: #{tpu_custom_call.1} parent=5 // pred_check_branch
      %155 = sbr.rel (%p153) target = $region24
    $region23: #{tpu_custom_call.1} parent=5 // pred_region
      // Predicated region
      $region25: #{tpu_custom_call.1} parent=23 // pred_check
        %p156 = pneg %p31
      $region26: #{tpu_custom_call.1} parent=23 // pred_check_branch
        %158 = sbr.rel (%p156) target = $region28
      $region27: #{tpu_custom_call.1} parent=23 // pred_region
        %s159 = smul.u32 4, %s11
        %p160 = scmp.lt.s32.totalorder %s159, 15
        %s161 = scalar_select %p160, %s159, 15
        %s162 = smul.addr %s161, 8
        %s163 = scalar_lea.vmem %s0, %s162
        %s164 = smul.u32 4, %s11
      $region28: #{tpu_custom_call.1} parent=23 // pred_fallthru
        _
    $region24: #{tpu_custom_call.1} parent=5 // pred_fallthru
      _
    %p165 = scmp.le.s32.totalorder 1, %s11
    %p166 = scmp.lt.s32.totalorder %s11, 5
    %p167 = pnand %p165, %p166
    %p168 = pneg %p167
    // Predicated region
    $region29: #{tpu_custom_call.1} parent=5 // pred_check
      _
    $region30: #{tpu_custom_call.1} parent=5 // pred_check_branch
      %170 = sbr.rel (%p167) target = $region32
    $region31: #{tpu_custom_call.1} parent=5 // pred_region
      %s171 = ssub.s32 %s11, 1
      %s172 = smul.u32 4, %s16
      %p173 = scmp.lt.s32.totalorder %s172, 15
      %s174 = scalar_select %p173, %s172, 15
      %s175 = smul.addr %s174, 8
      %s176 = scalar_lea.vmem %s0, %s175
      %p177 = pneg %p37
      %p178 = pneg %p34
      %p179 = pneg %p58
      %p180 = pneg %p55
      %p181 = pneg %p79
      %p182 = pneg %p76
      %p183 = pneg %p105
      %p184 = pneg %p102
      %s185 = smul.u32 2, %s16
      %p186 = scmp.lt.s32.totalorder %s185, 7
      %s187 = scalar_select %p186, %s185, 7
      %s188 = smul.addr %s187, 8
      %s189 = scalar_lea.vmem %s3, %s188
      %p190 = pneg %p131
      %p191 = pneg %p128
      %p192 = scmp.lt.s32.totalorder %s16, 3
      %s193 = scalar_select %p192, %s16, 3
      %s194 = smul.addr %s193, 8
      %s195 = scalar_lea.vmem %s4, %s194
      %s196 = smul.u32 4, %s16
      %p197 = scmp.lt.s32.totalorder %s196, 15
      %s198 = scalar_select %p197, %s196, 15
      %s199 = smul.addr %s198, 8
      %s200 = scalar_lea.vmem %s0, %s199
      %s201 = smul.u32 4, %s16
      %s202 = smul.u32 2, %s16
      %p203 = scmp.lt.s32.totalorder %s202, 7
      %s204 = scalar_select %p203, %s202, 7
      %s205 = smul.addr %s204, 8
      %s206 = scalar_lea.vmem %s3, %s205
      %s207 = smul.u32 2, %s16
      %p208 = scmp.lt.s32.totalorder %s16, 3
      %s209 = scalar_select %p208, %s16, 3
      %s210 = smul.addr %s209, 8
      %s211 = scalar_lea.vmem %s4, %s210
      %v212 = vld [vmem:[%s200] sm:$0xff]
      %v213 = vld [vmem:[%s200 + $0x8] sm:$0xff]
      %v214 = vld [vmem:[%s200 + $0x10] sm:$0xff]
      %v215 = vld [vmem:[%s200 + $0x18] sm:$0xff]
      %v216 = vld [vmem:[%s1] sm:$0xff]
      %v217 = vld [vmem:[%s1 + $0x8] sm:$0xff]
      %vm218 = vcmask 130048
      %v220 = vsel %vm218, %v212, 0
      %v223 = vsel %vm218, %v213, 0
      %v226 = vsel %vm218, %v214, 0
      %v229 = vsel %vm218, %v215, 0
      %231 = vmatpush.msra.mxu0 0.0
      %232 = vmatpush.msra.mxu0 0.0
      %233 = vmatpush.msra.mxu0 0.0
      %234 = vmatpush.msra.mxu0 0.0
      %235 = vmatpush.msra.mxu0 0.0
      %236 = vmatpush.msra.mxu0 0.0
      %237 = vmatpush.msra.mxu0 0.0
      %238 = vmatpush.msra.mxu0 0.0
      %239 = vmatpush.msra.mxu0 0.0
      %240 = vmatpush.msra.mxu0 0.0
      %241 = vmatpush.msra.mxu0 0.0
      %242 = vmatpush.msra.mxu0 0.0
      %243 = vmatpush.msra.mxu0 0.0
      %244 = vmatpush.msra.mxu0 0.0
      %245 = vmatpush.msra.mxu0 %v217
      %246 = vmatpush.msra.mxu0 %v216
      %247 = vmatmul.f32.gmra.mxu0 %v220
      %v248 = vpop.f32.mrf.mxu0
      %v249 = vadd.f32 0.0, %v248
      %250 = vmatmul.f32.gmra.mxu0 %v223
      %v251 = vpop.f32.mrf.mxu0
      %v252 = vadd.f32 0.0, %v251
      %253 = vmatmul.f32.gmra.mxu0 %v226
      %v254 = vpop.f32.mrf.mxu0
      %v255 = vadd.f32 0.0, %v254
      %256 = vmatmul.f32.gmra.mxu0 %v229
      %v257 = vpop.f32.mrf.mxu0
      %v258 = vadd.f32 0.0, %v257
      %259 = vdwg.mxu0
      %vm260 = vcmask 64512
      %261 = vst.msk [vmem:[#allocation2] sm:$0xff] %vm260, %v249
      %262 = vst.msk [vmem:[#allocation2 + $0x8] sm:$0xff] %vm260, %v252
      %263 = vst.msk [vmem:[#allocation2 + $0x10] sm:$0xff] %vm260, %v255
      %264 = vst.msk [vmem:[#allocation2 + $0x18] sm:$0xff] %vm260, %v258
      %v265 = vld [vmem:[#allocation2] ss:$2 sm:$0xff]
      %s266 = scalar_lea.vmem [#allocation2], 16
      %v267 = vld [vmem:[%s266] ss:$2 sm:$0xff]
      %s268 = scalar_lea.vmem [#allocation2], 1
      %v269 = vld [vmem:[%s268] ss:$2 sm:$0xff]
      %s270 = scalar_lea.vmem [#allocation2], 17
      %v271 = vld [vmem:[%s270] ss:$2 sm:$0xff]
      %v272 = vadd.f32 %v265, %v269
      %v273 = vadd.f32 %v267, %v271
      %v274 = vmul.f32 %v272, 0.25
      %v275 = vmul.f32 %v273, 0.25
      %276 = vst.msk [vmem:[%s206] sm:$0xff] %vm260, %v274
      %277 = vst.msk [vmem:[%s206 + $0x8] sm:$0xff] %vm260, %v275
      %v278 = vld [vmem:[%s2] sm:$0xff]
      %v280 = vsel %vm260, %v272, 0
      %v283 = vsel %vm260, %v273, 0
      %285 = vmatpush.msra.mxu0 0.0
      %286 = vmatpush.msra.mxu0 0.0
      %287 = vmatpush.msra.mxu0 0.0
      %288 = vmatpush.msra.mxu0 0.0
      %289 = vmatpush.msra.mxu0 0.0
      %290 = vmatpush.msra.mxu0 0.0
      %291 = vmatpush.msra.mxu0 0.0
      %292 = vmatpush.msra.mxu0 0.0
      %293 = vmatpush.msra.mxu0 0.0
      %294 = vmatpush.msra.mxu0 0.0
      %295 = vmatpush.msra.mxu0 0.0
      %296 = vmatpush.msra.mxu0 0.0
      %297 = vmatpush.msra.mxu0 0.0
      %298 = vmatpush.msra.mxu0 0.0
      %299 = vmatpush.msra.mxu0 0.0
      %300 = vmatpush.msra.mxu0 %v278
      %301 = vmatmul.f32.gmra.mxu0 %v280
      %v302 = vpop.f32.mrf.mxu0
      %v303 = vadd.f32 0.0, %v302
      %304 = vmatmul.f32.gmra.mxu0 %v283
      %v305 = vpop.f32.mrf.mxu0
      %v306 = vadd.f32 0.0, %v305
      %307 = vdwg.mxu0
      %vm308 = vcmask 31744
      %309 = vst.msk [vmem:[#allocation3] sm:$0xff] %vm308, %v303
      %310 = vst.msk [vmem:[#allocation3 + $0x8] sm:$0xff] %vm308, %v306
      %v311 = vld [vmem:[#allocation3] ss:$2 sm:$0xff]
      %s312 = scalar_lea.vmem [#allocation3], 1
      %v313 = vld [vmem:[%s312] ss:$2 sm:$0xff]
      %v314 = vadd.f32 %v311, %v313
      %v315 = vmul.f32 %v314, 0.0625
      %316 = vst.msk [vmem:[%s211] sm:$0xff] %vm308, %v315
      %s317 = smul.u32 2, %s16
      %p318 = scmp.lt.s32.totalorder %s317, 7
      %s319 = scalar_select %p318, %s317, 7
      %s320 = smul.addr %s319, 8
      %s321 = scalar_lea.vmem %s3, %s320
      %p322 = scmp.lt.s32.totalorder %s16, 3
      %s323 = scalar_select %p322, %s16, 3
      %s324 = smul.addr %s323, 8
      %s325 = scalar_lea.vmem %s4, %s324
      // Predicated region
      $region33: #{tpu_custom_call.1} parent=31 // pred_check
        %p326 = pneg %p102
      $region34: #{tpu_custom_call.1} parent=31 // pred_check_branch
        %328 = sbr.rel (%p326) target = $region36
      $region35: #{tpu_custom_call.1} parent=31 // pred_region
        %s329 = smul.u32 2, %s16
      $region36: #{tpu_custom_call.1} parent=31 // pred_fallthru
        _
      // Predicated region
      $region37: #{tpu_custom_call.1} parent=31 // pred_check
        %p330 = pneg %p128
      $region38: #{tpu_custom_call.1} parent=31 // pred_check_branch
        %332 = sbr.rel (%p330) target = $region40
      $region39: #{tpu_custom_call.1} parent=31 // pred_region
        _
      $region40: #{tpu_custom_call.1} parent=31 // pred_fallthru
        _
    $region32: #{tpu_custom_call.1} parent=5 // pred_fallthru
      _
    %p333 = scmp.le.s32.totalorder 2, %s11
    // Predicated region
    $region41: #{tpu_custom_call.1} parent=5 // pred_check
      %p334 = pneg %p333
    $region42: #{tpu_custom_call.1} parent=5 // pred_check_branch
      %336 = sbr.rel (%p334) target = $region44
    $region43: #{tpu_custom_call.1} parent=5 // pred_region
      %s337 = ssub.s32 %s11, 2
      // Predicated region
      $region45: #{tpu_custom_call.1} parent=43 // pred_check
        %p338 = pneg %p108
      $region46: #{tpu_custom_call.1} parent=43 // pred_check_branch
        %340 = sbr.rel (%p338) target = $region48
      $region47: #{tpu_custom_call.1} parent=43 // pred_region
        %s341 = smul.u32 2, %s17
        %p342 = scmp.lt.s32.totalorder %s341, 7
        %s343 = scalar_select %p342, %s341, 7
        %s344 = smul.addr %s343, 8
        %s345 = scalar_lea.vmem %s3, %s344
      $region48: #{tpu_custom_call.1} parent=43 // pred_fallthru
        _
      // Predicated region
      $region49: #{tpu_custom_call.1} parent=43 // pred_check
        %p346 = pneg %p134
      $region50: #{tpu_custom_call.1} parent=43 // pred_check_branch
        %348 = sbr.rel (%p346) target = $region52
      $region51: #{tpu_custom_call.1} parent=43 // pred_region
        %p349 = scmp.lt.s32.totalorder %s17, 3
        %s350 = scalar_select %p349, %s17, 3
        %s351 = smul.addr %s350, 8
        %s352 = scalar_lea.vmem %s4, %s351
      $region52: #{tpu_custom_call.1} parent=43 // pred_fallthru
        _
    $region44: #{tpu_custom_call.1} parent=5 // pred_fallthru
      _
  $region6: #{tpu_custom_call.1} parent=0 // loop_footer
    %s15 = sadd.s32 1, %s11
  $region7: #{tpu_custom_call.1} parent=0 // loop_footer_branch
    %10 = sbr.rel target = $region3
  $region8: #{tpu_custom_call.1} parent=0 // loop_exit
    _

</llo_original>
